<compile_context>
chip_gen: v7x
topology: tpu7x:2x2x1
jax: 0.10.0
libtpu: 0.0.40
codegen_flags: <defaults>
</compile_context>

<pallas_src>
import functools

import jax
import jax.numpy as jnp
from jax.experimental import pallas as pl
from jax.experimental.pallas import tpu as pltpu

LANE = 128


def dqn_kernel(x_ref, w1_ref, b1_ref, w2_ref, b2_ref, w3_ref, b3_ref, o_ref):
    cdt = w1_ref.dtype  # compute dtype for MXU inputs (bf16 or f32)
    # fc1 + relu  (f32 accumulation, f32 bias add / relu ride in VPU slots)
    x = x_ref[...].astype(cdt)
    h1 = jnp.dot(x, w1_ref[...], preferred_element_type=jnp.float32) + b1_ref[...]
    h1 = jnp.maximum(h1, 0.0).astype(cdt)
    # fc2 + relu
    h2 = jnp.dot(h1, w2_ref[...], preferred_element_type=jnp.float32) + b2_ref[...]
    h2 = jnp.maximum(h2, 0.0).astype(cdt)
    # fc3 (no activation); output columns are zero-padded to a lane-dense width
    out = jnp.dot(h2, w3_ref[...], preferred_element_type=jnp.float32) + b3_ref[...]
    o_ref[...] = out.astype(o_ref.dtype)


@functools.partial(jax.jit, static_argnames=("block_b", "use_bf16"))
def dqn_forward(x, w1, b1, w2, b2, w3, b3, *, block_b=128, use_bf16=True):
    """x: (B, in_dim) f32. Weights are (in, out); biases are (1, out). Returns (B, out_dim) f32."""
    B, in_dim = x.shape
    out_dim = w3.shape[1]

    # Pad output columns to a multiple of 128 lanes (dense, unmasked stores).
    out_pad = pl.cdiv(out_dim, LANE) * LANE
    w3p = jnp.pad(w3, ((0, 0), (0, out_pad - out_dim)))
    b3p = jnp.pad(b3, ((0, 0), (0, out_pad - out_dim)))

    # Pad batch to a multiple of the batch tile; padded rows are sliced off at the end.
    n_blocks = pl.cdiv(B, block_b)
    Bp = n_blocks * block_b
    if Bp != B:
        x = jnp.pad(x, ((0, Bp - B), (0, 0)))

    cdt = jnp.bfloat16 if use_bf16 else x.dtype
    w1c = w1.astype(cdt)
    w2c = w2.astype(cdt)
    w3c = w3p.astype(cdt)

    def const_spec(shape):
        # Whole-array block, same block every grid step -> weights stay resident in VMEM.
        return pl.BlockSpec(shape, lambda i: tuple(0 for _ in shape))

    out_padded = pl.pallas_call(
        dqn_kernel,
        out_shape=jax.ShapeDtypeStruct((Bp, out_pad), jnp.float32),
        grid=(n_blocks,),
        in_specs=[
            pl.BlockSpec((block_b, in_dim), lambda i: (i, 0)),  # x: batch-tiled
            const_spec(w1c.shape),
            const_spec(b1.shape),
            const_spec(w2c.shape),
            const_spec(b2.shape),
            const_spec(w3c.shape),
            const_spec(b3p.shape),
        ],
        out_specs=pl.BlockSpec((block_b, out_pad), lambda i: (i, 0)),
        compiler_params=pltpu.CompilerParams(
            dimension_semantics=("parallel",),  # shard batch tiles across TCs on v7x
        ),
    )(x, w1c, b1, w2c, b2, w3c, b3p)

    return out_padded[:B, :out_dim]


def init_params(key, input_dim, hidden_dim, output_dim):
    """Deterministic init mirroring nn.Linear default (uniform(-1/sqrt(fan_in), 1/sqrt(fan_in))).
    Weights stored as (in, out) = torch_weight.T."""
    ks = jax.random.split(key, 6)

    def linear(kw, kb, fan_in, fan_out):
        bound = 1.0 / jnp.sqrt(fan_in)
        w = jax.random.uniform(kw, (fan_in, fan_out), jnp.float32, -bound, bound)
        b = jax.random.uniform(kb, (1, fan_out), jnp.float32, -bound, bound)
        return w, b

    w1, b1 = linear(ks[0], ks[1], input_dim, hidden_dim)
    w2, b2 = linear(ks[2], ks[3], hidden_dim, hidden_dim)
    w3, b3 = linear(ks[4], ks[5], hidden_dim, output_dim)
    return w1, b1, w2, b2, w3, b3


if __name__ == "__main__":
    # CartPole-v1: observation dim = 4, action dim = 2.
    input_dim, hidden_dim, output_dim = 4, 128, 2
    batch = 8

    key = jax.random.PRNGKey(0)
    k_params, k_x = jax.random.split(key)
    w1, b1, w2, b2, w3, b3 = init_params(k_params, input_dim, hidden_dim, output_dim)
    x = jax.random.normal(k_x, (batch, input_dim), jnp.float32)

    out = dqn_forward(x, w1, b1, w2, b2, w3, b3)
    out = jax.block_until_ready(out)

    # Pure-JAX f32 reference check (bf16 MXU inputs + f32 accum -> relaxed tolerance).
    ref = jnp.maximum(x @ w1 + b1, 0.0)
    ref = jnp.maximum(ref @ w2 + b2, 0.0)
    ref = ref @ w3 + b3
    assert out.shape == (batch, output_dim)
    assert jnp.allclose(out, ref, atol=2e-2, rtol=2e-2), float(jnp.max(jnp.abs(out - ref)))

    print("KERNEL_OK")
</pallas_src>

<mosaic_0001>
module attributes {stable_mosaic.version = 11 : i64} {
  func.func @dqn_kernel(%arg0: i32, %arg1: memref<128x4xf32, #tpu.memory_space<vmem>>, %arg2: memref<4x128xbf16, #tpu.memory_space<vmem>>, %arg3: memref<1x128xf32, #tpu.memory_space<vmem>>, %arg4: memref<128x128xbf16, #tpu.memory_space<vmem>>, %arg5: memref<1x128xf32, #tpu.memory_space<vmem>>, %arg6: memref<128x128xbf16, #tpu.memory_space<vmem>>, %arg7: memref<1x128xf32, #tpu.memory_space<vmem>>, %arg8: memref<128x128xf32, #tpu.memory_space<vmem>>) attributes {dimension_semantics = [#tpu.dimension_semantics<parallel>], iteration_bounds = array<i64: 1>, scalar_prefetch = 0 : i64, scratch_operands = 0 : i64, tpu.core_type = #tpu.core_type<tc>, window_params = [{transform_indices = @transform_0, window_bounds = array<i64: 128, 4>}, {pipeline_mode = #tpu.pipeline_mode<synchronous>, transform_indices = @transform_1, window_bounds = array<i64: 4, 128>}, {pipeline_mode = #tpu.pipeline_mode<synchronous>, transform_indices = @transform_2, window_bounds = array<i64: 1, 128>}, {pipeline_mode = #tpu.pipeline_mode<synchronous>, transform_indices = @transform_3, window_bounds = array<i64: 128, 128>}, {pipeline_mode = #tpu.pipeline_mode<synchronous>, transform_indices = @transform_4, window_bounds = array<i64: 1, 128>}, {pipeline_mode = #tpu.pipeline_mode<synchronous>, transform_indices = @transform_5, window_bounds = array<i64: 128, 128>}, {pipeline_mode = #tpu.pipeline_mode<synchronous>, transform_indices = @transform_6, window_bounds = array<i64: 1, 128>}, {transform_indices = @transform_7, window_bounds = array<i64: 128, 128>}]} {
    %c0 = arith.constant 0 : index
    %c0_0 = arith.constant 0 : index
    %0 = vector.load %arg1[%c0, %c0_0] : memref<128x4xf32, #tpu.memory_space<vmem>>, vector<128x4xf32>
    %1 = arith.truncf %0 : vector<128x4xf32> to vector<128x4xbf16>
    %c0_1 = arith.constant 0 : index
    %c0_2 = arith.constant 0 : index
    %2 = vector.load %arg2[%c0_1, %c0_2] : memref<4x128xbf16, #tpu.memory_space<vmem>>, vector<4x128xbf16>
    %cst = arith.constant dense<0.000000e+00> : vector<128x128xf32>
    %3 = tpu.matmul %1, %2, %cst {dimension_numbers = #tpu.dot_dimension_numbers<[1], [0], [0], [1], [0, 0, 1, 1], [], []>} : vector<128x4xbf16>, vector<4x128xbf16>, vector<128x128xf32> -> vector<128x128xf32>
    %c0_3 = arith.constant 0 : index
    %c0_4 = arith.constant 0 : index
    %4 = vector.load %arg3[%c0_3, %c0_4] : memref<1x128xf32, #tpu.memory_space<vmem>>, vector<1x128xf32>
    %5 = vector.broadcast %4 : vector<1x128xf32> to vector<128x128xf32>
    %6 = arith.addf %3, %5 : vector<128x128xf32>
    %cst_5 = arith.constant 0.000000e+00 : f32
    %7 = vector.broadcast %cst_5 : f32 to vector<128x128xf32>
    %8 = arith.maximumf %6, %7 : vector<128x128xf32>
    %9 = arith.truncf %8 : vector<128x128xf32> to vector<128x128xbf16>
    %c0_6 = arith.constant 0 : index
    %c0_7 = arith.constant 0 : index
    %10 = vector.load %arg4[%c0_6, %c0_7] : memref<128x128xbf16, #tpu.memory_space<vmem>>, vector<128x128xbf16>
    %cst_8 = arith.constant dense<0.000000e+00> : vector<128x128xf32>
    %11 = tpu.matmul %9, %10, %cst_8 {dimension_numbers = #tpu.dot_dimension_numbers<[1], [0], [0], [1], [0, 0, 1, 1], [], []>} : vector<128x128xbf16>, vector<128x128xbf16>, vector<128x128xf32> -> vector<128x128xf32>
    %c0_9 = arith.constant 0 : index
    %c0_10 = arith.constant 0 : index
    %12 = vector.load %arg5[%c0_9, %c0_10] : memref<1x128xf32, #tpu.memory_space<vmem>>, vector<1x128xf32>
    %13 = vector.broadcast %12 : vector<1x128xf32> to vector<128x128xf32>
    %14 = arith.addf %11, %13 : vector<128x128xf32>
    %cst_11 = arith.constant 0.000000e+00 : f32
    %15 = vector.broadcast %cst_11 : f32 to vector<128x128xf32>
    %16 = arith.maximumf %14, %15 : vector<128x128xf32>
    %17 = arith.truncf %16 : vector<128x128xf32> to vector<128x128xbf16>
    %c0_12 = arith.constant 0 : index
    %c0_13 = arith.constant 0 : index
    %18 = vector.load %arg6[%c0_12, %c0_13] : memref<128x128xbf16, #tpu.memory_space<vmem>>, vector<128x128xbf16>
    %cst_14 = arith.constant dense<0.000000e+00> : vector<128x128xf32>
    %19 = tpu.matmul %17, %18, %cst_14 {dimension_numbers = #tpu.dot_dimension_numbers<[1], [0], [0], [1], [0, 0, 1, 1], [], []>} : vector<128x128xbf16>, vector<128x128xbf16>, vector<128x128xf32> -> vector<128x128xf32>
    %c0_15 = arith.constant 0 : index
    %c0_16 = arith.constant 0 : index
    %20 = vector.load %arg7[%c0_15, %c0_16] : memref<1x128xf32, #tpu.memory_space<vmem>>, vector<1x128xf32>
    %21 = vector.broadcast %20 : vector<1x128xf32> to vector<128x128xf32>
    %22 = arith.addf %19, %21 : vector<128x128xf32>
    %c0_17 = arith.constant 0 : index
    %c0_18 = arith.constant 0 : index
    %23 = vector.load %arg8[%c0_17, %c0_18] : memref<128x128xf32, #tpu.memory_space<vmem>>, vector<128x128xf32>
    tpu.vector_store %arg8[%c0_17, %c0_18], %22 {strides = array<i32>} : memref<128x128xf32, #tpu.memory_space<vmem>>, vector<128x128xf32>,
    return
  }
  func.func @transform_0(%arg0: i32) -> (i32, i32) {
    %c0_i32 = arith.constant 0 : i32
    %c0_i32_0 = arith.constant 0 : i32
    return %arg0, %c0_i32 : i32, i32
  }
  func.func @transform_1(%arg0: i32) -> (i32, i32) {
    %c0_i32 = arith.constant 0 : i32
    %c0_i32_0 = arith.constant 0 : i32
    %c0_i32_1 = arith.constant 0 : i32
    return %c0_i32, %c0_i32_0 : i32, i32
  }
  func.func @transform_2(%arg0: i32) -> (i32, i32) {
    %c0_i32 = arith.constant 0 : i32
    %c0_i32_0 = arith.constant 0 : i32
    %c0_i32_1 = arith.constant 0 : i32
    return %c0_i32, %c0_i32_0 : i32, i32
  }
  func.func @transform_3(%arg0: i32) -> (i32, i32) {
    %c0_i32 = arith.constant 0 : i32
    %c0_i32_0 = arith.constant 0 : i32
    %c0_i32_1 = arith.constant 0 : i32
    return %c0_i32, %c0_i32_0 : i32, i32
  }
  func.func @transform_4(%arg0: i32) -> (i32, i32) {
    %c0_i32 = arith.constant 0 : i32
    %c0_i32_0 = arith.constant 0 : i32
    %c0_i32_1 = arith.constant 0 : i32
    return %c0_i32, %c0_i32_0 : i32, i32
  }
  func.func @transform_5(%arg0: i32) -> (i32, i32) {
    %c0_i32 = arith.constant 0 : i32
    %c0_i32_0 = arith.constant 0 : i32
    %c0_i32_1 = arith.constant 0 : i32
    return %c0_i32, %c0_i32_0 : i32, i32
  }
  func.func @transform_6(%arg0: i32) -> (i32, i32) {
    %c0_i32 = arith.constant 0 : i32
    %c0_i32_0 = arith.constant 0 : i32
    %c0_i32_1 = arith.constant 0 : i32
    return %c0_i32, %c0_i32_0 : i32, i32
  }
  func.func @transform_7(%arg0: i32) -> (i32, i32) {
    %c0_i32 = arith.constant 0 : i32
    %c0_i32_0 = arith.constant 0 : i32
    return %arg0, %c0_i32 : i32, i32
  }
}

</mosaic_0001>

<llo_original>
// kernel: dqn_forward.1
$region0: #{dqn_forward.1}
  #allocation0 [shape = 'u32[]', space=smem, size = 0x4, offset = 0x4, fixed_abs, tag = 'smem constant byte address 0x4 - core index']
  #allocation1 [shape = 'u32[144,128]{1,0:T(1,128)}', space=vmem, size = 0x12000, scoped, tag = 'internal scratch']
  %s0 = inlined_call_operand.vmem [shape: f32[128,4], index: 0, kind: input, shape index: {}]
  %s1 = inlined_call_operand.vmem [shape: bf16[4,128], index: 1, kind: input, shape index: {}]
  %s2 = inlined_call_operand.vmem [shape: f32[1,128], index: 2, kind: input, shape index: {}]
  %s3 = inlined_call_operand.vmem [shape: bf16[128,128], index: 3, kind: input, shape index: {}]
  %s4 = inlined_call_operand.vmem [shape: f32[1,128], index: 4, kind: input, shape index: {}]
  %s5 = inlined_call_operand.vmem [shape: bf16[128,128], index: 5, kind: input, shape index: {}]
  %s6 = inlined_call_operand.vmem [shape: f32[1,128], index: 6, kind: input, shape index: {}]
  %s7 = inlined_call_operand.vmem [shape: f32[128,128], index: 7, kind: output, shape index: {}]
  %s8 = sld [smem:[#allocation0]]
  $region38: #{dqn_forward.1} parent=0
    _
  %s10 = ssub.s32 1, %s8
  %s11 = scalar_select 0, %s10, %s8
  // Predicated region
  $region2: #{dqn_forward.1} parent=0 // pred_check
    _
  $region3: #{dqn_forward.1} parent=0 // pred_check_branch
    %13 = sbr.rel (0) target = $region5
  $region4: #{dqn_forward.1} parent=0 // pred_region
    _
  $region5: #{dqn_forward.1} parent=0 // pred_fallthru
    _
  // Predicated region
  $region6: #{dqn_forward.1} parent=0 // pred_check
    _
  $region7: #{dqn_forward.1} parent=0 // pred_check_branch
    %15 = sbr.rel (0) target = $region9
  $region8: #{dqn_forward.1} parent=0 // pred_region
    _
  $region9: #{dqn_forward.1} parent=0 // pred_fallthru
    _
  // Predicated region
  $region10: #{dqn_forward.1} parent=0 // pred_check
    _
  $region11: #{dqn_forward.1} parent=0 // pred_check_branch
    %17 = sbr.rel (0) target = $region13
  $region12: #{dqn_forward.1} parent=0 // pred_region
    _
  $region13: #{dqn_forward.1} parent=0 // pred_fallthru
    _
  // Predicated region
  $region14: #{dqn_forward.1} parent=0 // pred_check
    _
  $region15: #{dqn_forward.1} parent=0 // pred_check_branch
    %19 = sbr.rel (0) target = $region17
  $region16: #{dqn_forward.1} parent=0 // pred_region
    _
  $region17: #{dqn_forward.1} parent=0 // pred_fallthru
    _
  // Predicated region
  $region18: #{dqn_forward.1} parent=0 // pred_check
    _
  $region19: #{dqn_forward.1} parent=0 // pred_check_branch
    %21 = sbr.rel (0) target = $region21
  $region20: #{dqn_forward.1} parent=0 // pred_region
    _
  $region21: #{dqn_forward.1} parent=0 // pred_fallthru
    _
  // Predicated region
  $region22: #{dqn_forward.1} parent=0 // pred_check
    _
  $region23: #{dqn_forward.1} parent=0 // pred_check_branch
    %23 = sbr.rel (0) target = $region25
  $region24: #{dqn_forward.1} parent=0 // pred_region
    _
  $region25: #{dqn_forward.1} parent=0 // pred_fallthru
    _
  // Predicated region
  $region26: #{dqn_forward.1} parent=0 // pred_check
    _
  $region27: #{dqn_forward.1} parent=0 // pred_check_branch
    %25 = sbr.rel (0) target = $region29
  $region28: #{dqn_forward.1} parent=0 // pred_region
    _
  $region29: #{dqn_forward.1} parent=0 // pred_fallthru
    _
  %v27 = vld [vmem:[%s0] sm:$0xff]
  %v28 = vld [vmem:[%s0 + $0x8] sm:$0xff]
  %v29 = vld [vmem:[%s0 + $0x10] sm:$0xff]
  %v30 = vld [vmem:[%s0 + $0x18] sm:$0xff]
  %v31 = vld [vmem:[%s0 + $0x20] sm:$0xff]
  %v32 = vld [vmem:[%s0 + $0x28] sm:$0xff]
  %v33 = vld [vmem:[%s0 + $0x30] sm:$0xff]
  %v34 = vld [vmem:[%s0 + $0x38] sm:$0xff]
  %v35 = vld [vmem:[%s0 + $0x40] sm:$0xff]
  %v36 = vld [vmem:[%s0 + $0x48] sm:$0xff]
  %v37 = vld [vmem:[%s0 + $0x50] sm:$0xff]
  %v38 = vld [vmem:[%s0 + $0x58] sm:$0xff]
  %v39 = vld [vmem:[%s0 + $0x60] sm:$0xff]
  %v40 = vld [vmem:[%s0 + $0x68] sm:$0xff]
  %v41 = vld [vmem:[%s0 + $0x70] sm:$0xff]
  %v42 = vld [vmem:[%s0 + $0x78] sm:$0xff]
  %v43 = vpack.c.bf16 %v28, %v27
  %v44 = vpack.c.bf16 %v30, %v29
  %v45 = vpack.c.bf16 %v32, %v31
  %v46 = vpack.c.bf16 %v34, %v33
  %v47 = vpack.c.bf16 %v36, %v35
  %v48 = vpack.c.bf16 %v38, %v37
  %v49 = vpack.c.bf16 %v40, %v39
  %v50 = vpack.c.bf16 %v42, %v41
  %v51 = vld [vmem:[%s1] sm:$0x3]
  %v52 = vld [vmem:[%s2] sm:$0x1]
  %v54 = vlaneseq
  %v55 = vshrl.u32 %v54, 7
  %v56 = vsub.s32 0, %v55
  %v57 = vrot.slane %v52, %v56
  %vm59 = vcmask 31744
  %v61 = vsel %vm59, %v43, 0
  %v64 = vsel %vm59, %v44, 0
  %v67 = vsel %vm59, %v45, 0
  %v70 = vsel %vm59, %v46, 0
  %v73 = vsel %vm59, %v47, 0
  %v76 = vsel %vm59, %v48, 0
  %v79 = vsel %vm59, %v49, 0
  %v82 = vsel %vm59, %v50, 0
  %vm84 = vcmask 1041408
  %v86 = vsel %vm84, %v51, 0
  %88 = vmatprep.subr.bf16.mxu0 0
  %89 = vmatpush1.bf16.msra.mxu0 %v86
  %90 = vmatprep.subr.bf16.mxu0 0
  %91 = vmatpush1.bf16.msra.mxu0 0
  %92 = vmatprep.subr.bf16.mxu0 0
  %93 = vmatpush1.bf16.msra.mxu0 0
  %94 = vmatprep.subr.bf16.mxu0 0
  %95 = vmatpush1.bf16.msra.mxu0 0
  %96 = vmatprep.subr.bf16.mxu0 0
  %97 = vmatpush1.bf16.msra.mxu0 0
  %98 = vmatprep.subr.bf16.mxu0 0
  %99 = vmatpush1.bf16.msra.mxu0 0
  %100 = vmatprep.subr.bf16.mxu0 0
  %101 = vmatpush1.bf16.msra.mxu0 0
  %102 = vmatprep.subr.bf16.mxu0 0
  %103 = vmatpush1.bf16.msra.mxu0 0
  %104 = vmatprep.subr.bf16.mxu0 0
  %105 = vmatpush1.bf16.msra.mxu0 0
  %106 = vmatprep.subr.bf16.mxu0 0
  %107 = vmatpush1.bf16.msra.mxu0 0
  %108 = vmatprep.subr.bf16.mxu0 0
  %109 = vmatpush1.bf16.msra.mxu0 0
  %110 = vmatprep.subr.bf16.mxu0 0
  %111 = vmatpush1.bf16.msra.mxu0 0
  %112 = vmatprep.subr.bf16.mxu0 0
  %113 = vmatpush1.bf16.msra.mxu0 0
  %114 = vmatprep.subr.bf16.mxu0 0
  %115 = vmatpush1.bf16.msra.mxu0 0
  %116 = vmatprep.subr.bf16.mxu0 0
  %117 = vmatpush1.bf16.msra.mxu0 0
  %118 = vmatprep.subr.bf16.mxu0 0
  %119 = vmatpush1.bf16.msra.mxu0 0
  %120 = vmatprep.mubr.bf16.mxu0 0
  %121 = vmatmul.mubr.bf16.gmra.mrb[0].mxu0 %v61
  %v122 = vpop.f32.mrb[0].mxu0
  %v123 = vadd.f32 %v57, %v122
  %v124 = vpop.f32.mrb[0].mxu0
  %v125 = vpop.f32.mrb[0].mxu0
  %v126 = vadd.f32 %v57, %v125
  %v127 = vpop.f32.mrb[0].mxu0
  %128 = vmatprep.mubr.bf16.mxu0 0
  %129 = vmatmul.mubr.bf16.gmra.mrb[0].mxu0 %v64
  %v130 = vpop.f32.mrb[0].mxu0
  %v131 = vadd.f32 %v57, %v130
  %v132 = vpop.f32.mrb[0].mxu0
  %v133 = vpop.f32.mrb[0].mxu0
  %v134 = vadd.f32 %v57, %v133
  %v135 = vpop.f32.mrb[0].mxu0
  %136 = vmatprep.mubr.bf16.mxu0 0
  %137 = vmatmul.mubr.bf16.gmra.mrb[0].mxu0 %v67
  %v138 = vpop.f32.mrb[0].mxu0
  %v139 = vadd.f32 %v57, %v138
  %v140 = vpop.f32.mrb[0].mxu0
  %v141 = vpop.f32.mrb[0].mxu0
  %v142 = vadd.f32 %v57, %v141
  %v143 = vpop.f32.mrb[0].mxu0
  %144 = vmatprep.mubr.bf16.mxu0 0
  %145 = vmatmul.mubr.bf16.gmra.mrb[0].mxu0 %v70
  %v146 = vpop.f32.mrb[0].mxu0
  %v147 = vadd.f32 %v57, %v146
  %v148 = vpop.f32.mrb[0].mxu0
  %v149 = vpop.f32.mrb[0].mxu0
  %v150 = vadd.f32 %v57, %v149
  %v151 = vpop.f32.mrb[0].mxu0
  %152 = vmatprep.mubr.bf16.mxu0 0
  %153 = vmatmul.mubr.bf16.gmra.mrb[0].mxu0 %v73
  %v154 = vpop.f32.mrb[0].mxu0
  %v155 = vadd.f32 %v57, %v154
  %v156 = vpop.f32.mrb[0].mxu0
  %v157 = vpop.f32.mrb[0].mxu0
  %v158 = vadd.f32 %v57, %v157
  %v159 = vpop.f32.mrb[0].mxu0
  %160 = vmatprep.mubr.bf16.mxu0 0
  %161 = vmatmul.mubr.bf16.gmra.mrb[0].mxu0 %v76
  %v162 = vpop.f32.mrb[0].mxu0
  %v163 = vadd.f32 %v57, %v162
  %v164 = vpop.f32.mrb[0].mxu0
  %v165 = vpop.f32.mrb[0].mxu0
  %v166 = vadd.f32 %v57, %v165
  %v167 = vpop.f32.mrb[0].mxu0
  %168 = vmatprep.mubr.bf16.mxu0 0
  %169 = vmatmul.mubr.bf16.gmra.mrb[0].mxu0 %v79
  %v170 = vpop.f32.mrb[0].mxu0
  %v171 = vadd.f32 %v57, %v170
  %v172 = vpop.f32.mrb[0].mxu0
  %v173 = vpop.f32.mrb[0].mxu0
  %v174 = vadd.f32 %v57, %v173
  %v175 = vpop.f32.mrb[0].mxu0
  %176 = vmatprep.mubr.bf16.mxu0 0
  %177 = vmatmul.mubr.bf16.gmra.mrb[0].mxu0 %v82
  %v178 = vpop.f32.mrb[0].mxu0
  %v179 = vadd.f32 %v57, %v178
  %v180 = vpop.f32.mrb[0].mxu0
  %v181 = vpop.f32.mrb[0].mxu0
  %v182 = vadd.f32 %v57, %v181
  %v183 = vpop.f32.mrb[0].mxu0
  %184 = vdwg.mxu0
  %v185 = vmax.f32 %v123, 0.0
  %v186 = vmax.f32 %v126, 0.0
  %v187 = vmax.f32 %v131, 0.0
  %v188 = vmax.f32 %v134, 0.0
  %v189 = vmax.f32 %v139, 0.0
  %v190 = vmax.f32 %v142, 0.0
  %v191 = vmax.f32 %v147, 0.0
  %v192 = vmax.f32 %v150, 0.0
  %v193 = vmax.f32 %v155, 0.0
  %v194 = vmax.f32 %v158, 0.0
  %v195 = vmax.f32 %v163, 0.0
  %v196 = vmax.f32 %v166, 0.0
  %v197 = vmax.f32 %v171, 0.0
  %v198 = vmax.f32 %v174, 0.0
  %v199 = vmax.f32 %v179, 0.0
  %v200 = vmax.f32 %v182, 0.0
  %v201 = vpack.c.bf16 %v186, %v185
  %v202 = vpack.c.bf16 %v188, %v187
  %v203 = vpack.c.bf16 %v190, %v189
  %v204 = vpack.c.bf16 %v192, %v191
  %v205 = vpack.c.bf16 %v194, %v193
  %v206 = vpack.c.bf16 %v196, %v195
  %v207 = vpack.c.bf16 %v198, %v197
  %v208 = vpack.c.bf16 %v200, %v199
  %v209 = vld [vmem:[%s3] sm:$0xf]
  %v210 = vld [vmem:[%s3 + $0x4] sm:$0xf]
  %v211 = vld [vmem:[%s3 + $0x8] sm:$0xf]
  %v212 = vld [vmem:[%s3 + $0xc] sm:$0xf]
  %v213 = vld [vmem:[%s3 + $0x10] sm:$0xf]
  %v214 = vld [vmem:[%s3 + $0x14] sm:$0xf]
  %v215 = vld [vmem:[%s3 + $0x18] sm:$0xf]
  %v216 = vld [vmem:[%s3 + $0x1c] sm:$0xf]
  %v217 = vld [vmem:[%s3 + $0x20] sm:$0xf]
  %v218 = vld [vmem:[%s3 + $0x24] sm:$0xf]
  %v219 = vld [vmem:[%s3 + $0x28] sm:$0xf]
  %v220 = vld [vmem:[%s3 + $0x2c] sm:$0xf]
  %v221 = vld [vmem:[%s3 + $0x30] sm:$0xf]
  %v222 = vld [vmem:[%s3 + $0x34] sm:$0xf]
  %v223 = vld [vmem:[%s3 + $0x38] sm:$0xf]
  %v224 = vld [vmem:[%s3 + $0x3c] sm:$0xf]
  %v225 = vld [vmem:[%s4] sm:$0x1]
  %v227 = vlaneseq
  %v228 = vshrl.u32 %v227, 7
  %v229 = vsub.s32 0, %v228
  %v230 = vrot.slane %v225, %v229
  %v248 = vunpack.c.l.b16 %v209
  %v249 = vunpack.c.l.b16 %v210
  %v250 = vunpack.c.l.b16 %v211
  %v251 = vunpack.c.l.b16 %v212
  %v252 = vunpack.c.l.b16 %v213
  %v253 = vunpack.c.l.b16 %v214
  %v254 = vunpack.c.l.b16 %v215
  %v255 = vunpack.c.l.b16 %v216
  %v256 = vunpack.c.l.b16 %v217
  %v257 = vunpack.c.l.b16 %v218
  %v258 = vunpack.c.l.b16 %v219
  %v259 = vunpack.c.l.b16 %v220
  %v260 = vunpack.c.l.b16 %v221
  %v261 = vunpack.c.l.b16 %v222
  %v262 = vunpack.c.l.b16 %v223
  %v263 = vunpack.c.l.b16 %v224
  %v264 = vpack.c.b16 %v249, %v248
  %v265 = vpack.c.b16 %v251, %v250
  %v266 = vpack.c.b16 %v253, %v252
  %v267 = vpack.c.b16 %v255, %v254
  %v268 = vpack.c.b16 %v257, %v256
  %v269 = vpack.c.b16 %v259, %v258
  %v270 = vpack.c.b16 %v261, %v260
  %v271 = vpack.c.b16 %v263, %v262
  %280 = vmatprep.subr.bf16.mxu0 0
  %281 = vmatpush1.bf16.msra.mxu0 %v264
  %282 = vmatprep.subr.bf16.mxu0 0
  %283 = vmatpush1.bf16.msra.mxu0 %v265
  %284 = vmatprep.subr.bf16.mxu0 0
  %285 = vmatpush1.bf16.msra.mxu0 %v266
  %286 = vmatprep.subr.bf16.mxu0 0
  %287 = vmatpush1.bf16.msra.mxu0 %v267
  %288 = vmatprep.subr.bf16.mxu0 0
  %289 = vmatpush1.bf16.msra.mxu0 %v268
  %290 = vmatprep.subr.bf16.mxu0 0
  %291 = vmatpush1.bf16.msra.mxu0 %v269
  %292 = vmatprep.subr.bf16.mxu0 0
  %293 = vmatpush1.bf16.msra.mxu0 %v270
  %294 = vmatprep.subr.bf16.mxu0 0
  %295 = vmatpush1.bf16.msra.mxu0 %v271
  %296 = vmatprep.subr.bf16.mxu0 0
  %297 = vmatpush1.bf16.msra.mxu0 0
  %298 = vmatprep.subr.bf16.mxu0 0
  %299 = vmatpush1.bf16.msra.mxu0 0
  %300 = vmatprep.subr.bf16.mxu0 0
  %301 = vmatpush1.bf16.msra.mxu0 0
  %302 = vmatprep.subr.bf16.mxu0 0
  %303 = vmatpush1.bf16.msra.mxu0 0
  %304 = vmatprep.subr.bf16.mxu0 0
  %305 = vmatpush1.bf16.msra.mxu0 0
  %306 = vmatprep.subr.bf16.mxu0 0
  %307 = vmatpush1.bf16.msra.mxu0 0
  %308 = vmatprep.subr.bf16.mxu0 0
  %309 = vmatpush1.bf16.msra.mxu0 0
  %310 = vmatprep.subr.bf16.mxu0 0
  %311 = vmatpush1.bf16.msra.mxu0 0
  %312 = vmatprep.mubr.bf16.mxu0 0
  %313 = vmatmul.mubr.bf16.gmra.mrb[0].mxu0 %v201
  %v314 = vpop.f32.mrb[0].mxu0
  %v315 = vadd.f32 %v230, %v314
  %v316 = vpop.f32.mrb[0].mxu0
  %v317 = vpop.f32.mrb[0].mxu0
  %v318 = vadd.f32 %v230, %v317
  %v319 = vpop.f32.mrb[0].mxu0
  %320 = vmatprep.mubr.bf16.mxu0 0
  %321 = vmatmul.mubr.bf16.gmra.mrb[0].mxu0 %v202
  %v322 = vpop.f32.mrb[0].mxu0
  %v323 = vadd.f32 %v230, %v322
  %v324 = vpop.f32.mrb[0].mxu0
  %v325 = vpop.f32.mrb[0].mxu0
  %v326 = vadd.f32 %v230, %v325
  %v327 = vpop.f32.mrb[0].mxu0
  %328 = vmatprep.mubr.bf16.mxu0 0
  %329 = vmatmul.mubr.bf16.gmra.mrb[0].mxu0 %v203
  %v330 = vpop.f32.mrb[0].mxu0
  %v331 = vadd.f32 %v230, %v330
  %v332 = vpop.f32.mrb[0].mxu0
  %v333 = vpop.f32.mrb[0].mxu0
  %v334 = vadd.f32 %v230, %v333
  %v335 = vpop.f32.mrb[0].mxu0
  %336 = vmatprep.mubr.bf16.mxu0 0
  %337 = vmatmul.mubr.bf16.gmra.mrb[0].mxu0 %v204
  %v338 = vpop.f32.mrb[0].mxu0
  %v339 = vadd.f32 %v230, %v338
  %v340 = vpop.f32.mrb[0].mxu0
  %v341 = vpop.f32.mrb[0].mxu0
  %v342 = vadd.f32 %v230, %v341
  %v343 = vpop.f32.mrb[0].mxu0
  %344 = vmatprep.mubr.bf16.mxu0 0
  %345 = vmatmul.mubr.bf16.gmra.mrb[0].mxu0 %v205
  %v346 = vpop.f32.mrb[0].mxu0
  %v347 = vadd.f32 %v230, %v346
  %v348 = vpop.f32.mrb[0].mxu0
  %v349 = vpop.f32.mrb[0].mxu0
  %v350 = vadd.f32 %v230, %v349
  %v351 = vpop.f32.mrb[0].mxu0
  %352 = vmatprep.mubr.bf16.mxu0 0
  %353 = vmatmul.mubr.bf16.gmra.mrb[0].mxu0 %v206
  %v354 = vpop.f32.mrb[0].mxu0
  %v355 = vadd.f32 %v230, %v354
  %v356 = vpop.f32.mrb[0].mxu0
  %v357 = vpop.f32.mrb[0].mxu0
  %v358 = vadd.f32 %v230, %v357
  %v359 = vpop.f32.mrb[0].mxu0
  %360 = vmatprep.mubr.bf16.mxu0 0
  %361 = vmatmul.mubr.bf16.gmra.mrb[0].mxu0 %v207
  %v362 = vpop.f32.mrb[0].mxu0
  %v363 = vadd.f32 %v230, %v362
  %v364 = vpop.f32.mrb[0].mxu0
  %v365 = vpop.f32.mrb[0].mxu0
  %v366 = vadd.f32 %v230, %v365
  %v367 = vpop.f32.mrb[0].mxu0
  %368 = vmatprep.mubr.bf16.mxu0 0
  %369 = vmatmul.mubr.bf16.gmra.mrb[0].mxu0 %v208
  %v370 = vpop.f32.mrb[0].mxu0
  %v371 = vadd.f32 %v230, %v370
  %v372 = vpop.f32.mrb[0].mxu0
  %v373 = vpop.f32.mrb[0].mxu0
  %v374 = vadd.f32 %v230, %v373
  %v375 = vpop.f32.mrb[0].mxu0
  %376 = vdwg.mxu0
  %v377 = vmax.f32 %v315, 0.0
  %v378 = vmax.f32 %v318, 0.0
  %v379 = vmax.f32 %v323, 0.0
  %v380 = vmax.f32 %v326, 0.0
  %v381 = vmax.f32 %v331, 0.0
  %v382 = vmax.f32 %v334, 0.0
  %v383 = vmax.f32 %v339, 0.0
  %v384 = vmax.f32 %v342, 0.0
  %v385 = vmax.f32 %v347, 0.0
  %v386 = vmax.f32 %v350, 0.0
  %v387 = vmax.f32 %v355, 0.0
  %v388 = vmax.f32 %v358, 0.0
  %v389 = vmax.f32 %v363, 0.0
  %v390 = vmax.f32 %v366, 0.0
  %v391 = vmax.f32 %v371, 0.0
  %v392 = vmax.f32 %v374, 0.0
  %v393 = vpack.c.bf16 %v378, %v377
  %v394 = vpack.c.bf16 %v380, %v379
  %v395 = vpack.c.bf16 %v382, %v381
  %v396 = vpack.c.bf16 %v384, %v383
  %v397 = vpack.c.bf16 %v386, %v385
  %v398 = vpack.c.bf16 %v388, %v387
  %v399 = vpack.c.bf16 %v390, %v389
  %v400 = vpack.c.bf16 %v392, %v391
  %v401 = vld [vmem:[%s5] sm:$0xf]
  %v402 = vld [vmem:[%s5 + $0x4] sm:$0xf]
  %v403 = vld [vmem:[%s5 + $0x8] sm:$0xf]
  %v404 = vld [vmem:[%s5 + $0xc] sm:$0xf]
  %v405 = vld [vmem:[%s5 + $0x10] sm:$0xf]
  %v406 = vld [vmem:[%s5 + $0x14] sm:$0xf]
  %v407 = vld [vmem:[%s5 + $0x18] sm:$0xf]
  %v408 = vld [vmem:[%s5 + $0x1c] sm:$0xf]
  %v409 = vld [vmem:[%s5 + $0x20] sm:$0xf]
  %v410 = vld [vmem:[%s5 + $0x24] sm:$0xf]
  %v411 = vld [vmem:[%s5 + $0x28] sm:$0xf]
  %v412 = vld [vmem:[%s5 + $0x2c] sm:$0xf]
  %v413 = vld [vmem:[%s5 + $0x30] sm:$0xf]
  %v414 = vld [vmem:[%s5 + $0x34] sm:$0xf]
  %v415 = vld [vmem:[%s5 + $0x38] sm:$0xf]
  %v416 = vld [vmem:[%s5 + $0x3c] sm:$0xf]
  %v417 = vld [vmem:[%s6] sm:$0x1]
  %v419 = vlaneseq
  %v420 = vshrl.u32 %v419, 7
  %v421 = vsub.s32 0, %v420
  %v422 = vrot.slane %v417, %v421
  %v440 = vunpack.c.l.b16 %v401
  %v441 = vunpack.c.l.b16 %v402
  %v442 = vunpack.c.l.b16 %v403
  %v443 = vunpack.c.l.b16 %v404
  %v444 = vunpack.c.l.b16 %v405
  %v445 = vunpack.c.l.b16 %v406
  %v446 = vunpack.c.l.b16 %v407
  %v447 = vunpack.c.l.b16 %v408
  %v448 = vunpack.c.l.b16 %v409
  %v449 = vunpack.c.l.b16 %v410
  %v450 = vunpack.c.l.b16 %v411
  %v451 = vunpack.c.l.b16 %v412
  %v452 = vunpack.c.l.b16 %v413
  %v453 = vunpack.c.l.b16 %v414
  %v454 = vunpack.c.l.b16 %v415
  %v455 = vunpack.c.l.b16 %v416
  %v456 = vpack.c.b16 %v441, %v440
  %v457 = vpack.c.b16 %v443, %v442
  %v458 = vpack.c.b16 %v445, %v444
  %v459 = vpack.c.b16 %v447, %v446
  %v460 = vpack.c.b16 %v449, %v448
  %v461 = vpack.c.b16 %v451, %v450
  %v462 = vpack.c.b16 %v453, %v452
  %v463 = vpack.c.b16 %v455, %v454
  %472 = vmatprep.subr.bf16.mxu0 0
  %473 = vmatpush1.bf16.msra.mxu0 %v456
  %474 = vmatprep.subr.bf16.mxu0 0
  %475 = vmatpush1.bf16.msra.mxu0 %v457
  %476 = vmatprep.subr.bf16.mxu0 0
  %477 = vmatpush1.bf16.msra.mxu0 %v458
  %478 = vmatprep.subr.bf16.mxu0 0
  %479 = vmatpush1.bf16.msra.mxu0 %v459
  %480 = vmatprep.subr.bf16.mxu0 0
  %481 = vmatpush1.bf16.msra.mxu0 %v460
  %482 = vmatprep.subr.bf16.mxu0 0
  %483 = vmatpush1.bf16.msra.mxu0 %v461
  %484 = vmatprep.subr.bf16.mxu0 0
  %485 = vmatpush1.bf16.msra.mxu0 %v462
  %486 = vmatprep.subr.bf16.mxu0 0
  %487 = vmatpush1.bf16.msra.mxu0 %v463
  %488 = vmatprep.subr.bf16.mxu0 0
  %489 = vmatpush1.bf16.msra.mxu0 0
  %490 = vmatprep.subr.bf16.mxu0 0
  %491 = vmatpush1.bf16.msra.mxu0 0
  %492 = vmatprep.subr.bf16.mxu0 0
  %493 = vmatpush1.bf16.msra.mxu0 0
  %494 = vmatprep.subr.bf16.mxu0 0
  %495 = vmatpush1.bf16.msra.mxu0 0
  %496 = vmatprep.subr.bf16.mxu0 0
  %497 = vmatpush1.bf16.msra.mxu0 0
  %498 = vmatprep.subr.bf16.mxu0 0
  %499 = vmatpush1.bf16.msra.mxu0 0
  %500 = vmatprep.subr.bf16.mxu0 0
  %501 = vmatpush1.bf16.msra.mxu0 0
  %502 = vmatprep.subr.bf16.mxu0 0
  %503 = vmatpush1.bf16.msra.mxu0 0
  %504 = vmatprep.mubr.bf16.mxu0 0
  %505 = vmatmul.mubr.bf16.gmra.mrb[0].mxu0 %v393
  %v506 = vpop.f32.mrb[0].mxu0
  %v507 = vadd.f32 %v422, %v506
  %v508 = vpop.f32.mrb[0].mxu0
  %v509 = vpop.f32.mrb[0].mxu0
  %v510 = vadd.f32 %v422, %v509
  %v511 = vpop.f32.mrb[0].mxu0
  %512 = vmatprep.mubr.bf16.mxu0 0
  %513 = vmatmul.mubr.bf16.gmra.mrb[0].mxu0 %v394
  %v514 = vpop.f32.mrb[0].mxu0
  %v515 = vadd.f32 %v422, %v514
  %v516 = vpop.f32.mrb[0].mxu0
  %v517 = vpop.f32.mrb[0].mxu0
  %v518 = vadd.f32 %v422, %v517
  %v519 = vpop.f32.mrb[0].mxu0
  %520 = vmatprep.mubr.bf16.mxu0 0
  %521 = vmatmul.mubr.bf16.gmra.mrb[0].mxu0 %v395
  %v522 = vpop.f32.mrb[0].mxu0
  %v523 = vadd.f32 %v422, %v522
  %v524 = vpop.f32.mrb[0].mxu0
  %v525 = vpop.f32.mrb[0].mxu0
  %v526 = vadd.f32 %v422, %v525
  %v527 = vpop.f32.mrb[0].mxu0
  %528 = vmatprep.mubr.bf16.mxu0 0
  %529 = vmatmul.mubr.bf16.gmra.mrb[0].mxu0 %v396
  %v530 = vpop.f32.mrb[0].mxu0
  %v531 = vadd.f32 %v422, %v530
  %v532 = vpop.f32.mrb[0].mxu0
  %v533 = vpop.f32.mrb[0].mxu0
  %v534 = vadd.f32 %v422, %v533
  %v535 = vpop.f32.mrb[0].mxu0
  %536 = vmatprep.mubr.bf16.mxu0 0
  %537 = vmatmul.mubr.bf16.gmra.mrb[0].mxu0 %v397
  %v538 = vpop.f32.mrb[0].mxu0
  %v539 = vadd.f32 %v422, %v538
  %v540 = vpop.f32.mrb[0].mxu0
  %v541 = vpop.f32.mrb[0].mxu0
  %v542 = vadd.f32 %v422, %v541
  %v543 = vpop.f32.mrb[0].mxu0
  %544 = vmatprep.mubr.bf16.mxu0 0
  %545 = vmatmul.mubr.bf16.gmra.mrb[0].mxu0 %v398
  %v546 = vpop.f32.mrb[0].mxu0
  %v547 = vadd.f32 %v422, %v546
  %v548 = vpop.f32.mrb[0].mxu0
  %v549 = vpop.f32.mrb[0].mxu0
  %v550 = vadd.f32 %v422, %v549
  %v551 = vpop.f32.mrb[0].mxu0
  %552 = vmatprep.mubr.bf16.mxu0 0
  %553 = vmatmul.mubr.bf16.gmra.mrb[0].mxu0 %v399
  %v554 = vpop.f32.mrb[0].mxu0
  %v555 = vadd.f32 %v422, %v554
  %v556 = vpop.f32.mrb[0].mxu0
  %v557 = vpop.f32.mrb[0].mxu0
  %v558 = vadd.f32 %v422, %v557
  %v559 = vpop.f32.mrb[0].mxu0
  %560 = vmatprep.mubr.bf16.mxu0 0
  %561 = vmatmul.mubr.bf16.gmra.mrb[0].mxu0 %v400
  %v562 = vpop.f32.mrb[0].mxu0
  %v563 = vadd.f32 %v422, %v562
  %v564 = vpop.f32.mrb[0].mxu0
  %v565 = vpop.f32.mrb[0].mxu0
  %v566 = vadd.f32 %v422, %v565
  %v567 = vpop.f32.mrb[0].mxu0
  %568 = vdwg.mxu0
  %569 = vst [vmem:[%s7] sm:$0xff] %v507
  %570 = vst [vmem:[%s7 + $0x8] sm:$0xff] %v510
  %571 = vst [vmem:[%s7 + $0x10] sm:$0xff] %v515
  %572 = vst [vmem:[%s7 + $0x18] sm:$0xff] %v518
  %573 = vst [vmem:[%s7 + $0x20] sm:$0xff] %v523
  %574 = vst [vmem:[%s7 + $0x28] sm:$0xff] %v526
  %575 = vst [vmem:[%s7 + $0x30] sm:$0xff] %v531
  %576 = vst [vmem:[%s7 + $0x38] sm:$0xff] %v534
  %577 = vst [vmem:[%s7 + $0x40] sm:$0xff] %v539
  %578 = vst [vmem:[%s7 + $0x48] sm:$0xff] %v542
  %579 = vst [vmem:[%s7 + $0x50] sm:$0xff] %v547
  %580 = vst [vmem:[%s7 + $0x58] sm:$0xff] %v550
  %581 = vst [vmem:[%s7 + $0x60] sm:$0xff] %v555
  %582 = vst [vmem:[%s7 + $0x68] sm:$0xff] %v558
  %583 = vst [vmem:[%s7 + $0x70] sm:$0xff] %v563
  %584 = vst [vmem:[%s7 + $0x78] sm:$0xff] %v566
  // Predicated region
  $region30: #{dqn_forward.1} parent=0 // pred_check
    _
  $region31: #{dqn_forward.1} parent=0 // pred_check_branch
    %586 = sbr.rel (0) target = $region33
  $region32: #{dqn_forward.1} parent=0 // pred_region
    _
  $region33: #{dqn_forward.1} parent=0 // pred_fallthru
    _
  // Predicated region
  $region34: #{dqn_forward.1} parent=0 // pred_check
    _
  $region35: #{dqn_forward.1} parent=0 // pred_check_branch
    %588 = sbr.rel (0) target = $region37
  $region36: #{dqn_forward.1} parent=0 // pred_region
    _
  $region37: #{dqn_forward.1} parent=0 // pred_fallthru
    _

</llo_original>
